<compile_context>
chip_gen: v7x
topology: tpu7x:2x2x1
jax: 0.10.0
libtpu: 0.0.40
codegen_flags: <defaults>
</compile_context>

<pallas_src>
import functools

import jax
import jax.numpy as jnp
from jax.experimental import pallas as pl
from jax.experimental.pallas import tpu as pltpu


def _nll_loss_kernel(pred_ref, target_ref, weight_ref, out_ref,
                     num_acc, den_acc, *, n_valid):
    i = pl.program_id(0)

    @pl.when(i == 0)
    def _init():
        num_acc[...] = jnp.zeros_like(num_acc)
        den_acc[...] = jnp.zeros_like(den_acc)

    pred = pred_ref[...].astype(jnp.float32)      # (TILE_N, C) log-probs
    tgt = target_ref[...]                         # (TILE_N, 1) int32
    w = weight_ref[...].astype(jnp.float32)       # (1, C)

    tile_n, c = pred.shape

    # Remainder-tile masking: global row index must be < n_valid.
    row_ids = jax.lax.broadcasted_iota(jnp.int32, (tile_n, c), 0) + i * tile_n
    class_ids = jax.lax.broadcasted_iota(jnp.int32, (tile_n, c), 1)
    hit = jnp.logical_and(class_ids == tgt, row_ids < n_valid)   # (TILE_N, C)

    w_b = jnp.broadcast_to(w, (tile_n, c))
    masked_w = jnp.where(hit, w_b, 0.0)                 # weight[target_i] scattered
    pred_safe = jnp.where(hit, pred, 0.0)               # guard against OOB garbage

    num_acc[...] += -jnp.sum(masked_w * pred_safe)      # sum_i w[t_i] * (-pred[i,t_i])
    den_acc[...] += jnp.sum(masked_w)                   # sum_i w[t_i]

    @pl.when(i == pl.num_programs(0) - 1)
    def _finalize():
        out_ref[...] = num_acc[...] / den_acc[...]


def nll_loss_pallas(pred, target, weight, *, tile_n=2048):
    """pred: (N, C) log-probs; target: (N,) int; weight: (C,) float.

    tile_n guidance: <= 4096 on v7x (64 MiB VMEM, lane-padded tiles),
    8192-16384 on v5e/v6e (128 MiB VMEM).
    """
    n, c = pred.shape
    tile_n = max(8, min(tile_n, ((n + 7) // 8) * 8))    # keep sublane-aligned
    num_tiles = pl.cdiv(n, tile_n)

    target2d = target.astype(jnp.int32).reshape(n, 1)
    weight2d = weight.astype(jnp.float32).reshape(1, c)

    kernel = functools.partial(_nll_loss_kernel, n_valid=n)

    out = pl.pallas_call(
        kernel,
        out_shape=jax.ShapeDtypeStruct((1, 1), jnp.float32),
        grid_spec=pltpu.PrefetchScalarGridSpec(
            num_scalar_prefetch=0,
            grid=(num_tiles,),
            in_specs=[
                pl.BlockSpec((tile_n, c), lambda i: (i, 0)),   # pred tile
                pl.BlockSpec((tile_n, 1), lambda i: (i, 0)),   # target tile
                pl.BlockSpec((1, c), lambda i: (0, 0)),        # weight (resident)
            ],
            out_specs=pl.BlockSpec((1, 1), lambda i: (0, 0)),  # scalar loss
            scratch_shapes=[
                pltpu.VMEM((1, 1), jnp.float32),   # num accumulator
                pltpu.VMEM((1, 1), jnp.float32),   # den accumulator
            ],
        ),
        compiler_params=pltpu.CompilerParams(
            dimension_semantics=("arbitrary",),     # output accumulated across grid
            vmem_limit_bytes=32 * 1024 * 1024,
        ),
        cost_estimate=pl.CostEstimate(
            flops=3 * n * c,
            transcendentals=0,
            bytes_accessed=n * c * pred.dtype.itemsize + n * 4 + c * 4 + 4,
        ),
    )(pred, target2d, weight2d)
    return out[0, 0]


class GetLoss:
    """JAX/Pallas equivalent of pointnet2_sem_seg.get_loss."""

    def __call__(self, pred, target, trans_feat, weight):
        # trans_feat is unused by the reference forward pass.
        return nll_loss_pallas(pred, target, weight)


if __name__ == "__main__":
    key = jax.random.PRNGKey(0)
    # Small but representative shapes: 600 points, 13 classes (sem-seg head).
    # tile_n=128 -> 5 grid steps including a partial remainder tile (88 rows).
    N, C = 600, 13

    k1, k2, k3, k4 = jax.random.split(key, 4)
    logits = jax.random.normal(k1, (N, C), dtype=jnp.float32)
    pred = jax.nn.log_softmax(logits, axis=-1)                 # log-probabilities
    target = jax.random.randint(k2, (N,), 0, C, dtype=jnp.int32)
    weight = jax.random.uniform(k3, (C,), dtype=jnp.float32, minval=0.5, maxval=1.5)
    trans_feat = jax.random.normal(k4, (2, 64, 64), dtype=jnp.float32)  # unused

    loss = nll_loss_pallas(pred, target, weight, tile_n=128)
    loss = jax.block_until_ready(loss)

    # Also exercise the class-style entry point with the default tile size.
    loss2 = GetLoss()(pred, target, trans_feat, weight)
    loss2 = jax.block_until_ready(loss2)

    # Pure-JAX reference (weighted-mean NLL, PyTorch semantics).
    w_t = weight[target]
    ref = -jnp.sum(w_t * pred[jnp.arange(N), target]) / jnp.sum(w_t)
    assert jnp.allclose(loss, ref, rtol=1e-5, atol=1e-6), (loss, ref)
    assert jnp.allclose(loss2, ref, rtol=1e-5, atol=1e-6), (loss2, ref)

    print("KERNEL_OK")
</pallas_src>

<mosaic_0001>
module attributes {stable_mosaic.version = 11 : i64} {
  func.func @_nll_loss_kernel(%arg0: i32, %arg1: memref<128x13xf32, #tpu.memory_space<vmem>>, %arg2: memref<128x1xi32, #tpu.memory_space<vmem>>, %arg3: memref<1x13xf32, #tpu.memory_space<vmem>>, %arg4: memref<1x1xf32, #tpu.memory_space<vmem>>, %arg5: memref<1x1xf32, #tpu.memory_space<vmem>>, %arg6: memref<1x1xf32, #tpu.memory_space<vmem>>) attributes {dimension_semantics = [#tpu.dimension_semantics<arbitrary>], iteration_bounds = array<i64: 5>, scalar_prefetch = 0 : i64, scratch_operands = 2 : i64, tpu.core_type = #tpu.core_type<tc>, window_params = [{transform_indices = @transform_0, window_bounds = array<i64: 128, 13>}, {transform_indices = @transform_1, window_bounds = array<i64: 128, 1>}, {pipeline_mode = #tpu.pipeline_mode<synchronous>, transform_indices = @transform_2, window_bounds = array<i64: 1, 13>}, {pipeline_mode = #tpu.pipeline_mode<synchronous>, transform_indices = @transform_3, window_bounds = array<i64: 1, 1>}]} {
    %c0_i32 = arith.constant 0 : i32
    %0 = arith.cmpi eq, %arg0, %c0_i32 : i32
    %1 = arith.extui %0 : i1 to i32
    %c0_i32_0 = arith.constant 0 : i32
    %2 = arith.cmpi ne, %1, %c0_i32_0 : i32
    scf.if %2 {
      %cst_19 = arith.constant 0.000000e+00 : f32
      %43 = vector.broadcast %cst_19 : f32 to vector<1x1xf32>
      %c0_20 = arith.constant 0 : index
      %c0_21 = arith.constant 0 : index
      %44 = vector.load %arg5[%c0_20, %c0_21] : memref<1x1xf32, #tpu.memory_space<vmem>>, vector<1x1xf32>
      tpu.vector_store %arg5[%c0_20, %c0_21], %43 {strides = array<i32>} : memref<1x1xf32, #tpu.memory_space<vmem>>, vector<1x1xf32>,
      %cst_22 = arith.constant 0.000000e+00 : f32
      %45 = vector.broadcast %cst_22 : f32 to vector<1x1xf32>
      %c0_23 = arith.constant 0 : index
      %c0_24 = arith.constant 0 : index
      %46 = vector.load %arg6[%c0_23, %c0_24] : memref<1x1xf32, #tpu.memory_space<vmem>>, vector<1x1xf32>
      tpu.vector_store %arg6[%c0_23, %c0_24], %45 {strides = array<i32>} : memref<1x1xf32, #tpu.memory_space<vmem>>, vector<1x1xf32>,
    } else {
    }
    %c0 = arith.constant 0 : index
    %c0_1 = arith.constant 0 : index
    %3 = vector.load %arg1[%c0, %c0_1] : memref<128x13xf32, #tpu.memory_space<vmem>>, vector<128x13xf32>
    %c0_2 = arith.constant 0 : index
    %c0_3 = arith.constant 0 : index
    %4 = vector.load %arg2[%c0_2, %c0_3] : memref<128x1xi32, #tpu.memory_space<vmem>>, vector<128x1xi32>
    %c0_4 = arith.constant 0 : index
    %c0_5 = arith.constant 0 : index
    %5 = vector.load %arg3[%c0_4, %c0_5] : memref<1x13xf32, #tpu.memory_space<vmem>>, vector<1x13xf32>
    %6 = tpu.iota {dimensions = array<i32: 0>} : vector<128x13xi32>
    %c128_i32 = arith.constant 128 : i32
    %7 = arith.muli %arg0, %c128_i32 : i32
    %8 = vector.broadcast %7 : i32 to vector<128x13xi32>
    %9 = arith.addi %6, %8 : vector<128x13xi32>
    %10 = tpu.iota {dimensions = array<i32: 1>} : vector<128x13xi32>
    %11 = vector.broadcast %4 : vector<128x1xi32> to vector<128x13xi32>
    %12 = arith.cmpi eq, %10, %11 : vector<128x13xi32>
    %c600_i32 = arith.constant 600 : i32
    %13 = vector.broadcast %c600_i32 : i32 to vector<128x13xi32>
    %14 = arith.cmpi slt, %9, %13 : vector<128x13xi32>
    %15 = arith.andi %12, %14 : vector<128x13xi1>
    %16 = vector.shape_cast %5 : vector<1x13xf32> to vector<1x13xf32>
    %17 = vector.broadcast %16 : vector<1x13xf32> to vector<128x13xf32>
    %cst = arith.constant 0.000000e+00 : f32
    %18 = vector.broadcast %cst : f32 to vector<128x13xf32>
    %19 = arith.select %15, %17, %18 : vector<128x13xi1>, vector<128x13xf32>
    %cst_6 = arith.constant 0.000000e+00 : f32
    %20 = vector.broadcast %cst_6 : f32 to vector<128x13xf32>
    %21 = arith.select %15, %3, %20 : vector<128x13xi1>, vector<128x13xf32>
    %c0_7 = arith.constant 0 : index
    %c0_8 = arith.constant 0 : index
    %22 = vector.load %arg5[%c0_7, %c0_8] : memref<1x1xf32, #tpu.memory_space<vmem>>, vector<1x1xf32>
    %23 = arith.mulf %19, %21 : vector<128x13xf32>
    %24 = vector.shape_cast %23 : vector<128x13xf32> to vector<1x128x13xf32>
    %cst_9 = arith.constant dense<0.000000e+00> : vector<1xf32>
    %25 = vector.multi_reduction <add>, %24, %cst_9 [1, 2] : vector<1x128x13xf32> to vector<1xf32>
    %26 = vector.shape_cast %25 : vector<1xf32> to vector<1x1x1xf32>
    %27 = vector.extract %26[0, 0, 0] : f32 from vector<1x1x1xf32>
    %cst_10 = arith.constant 0.000000e+00 : f32
    %28 = arith.subf %cst_10, %27 : f32
    %29 = vector.broadcast %28 : f32 to vector<1x1xf32>
    %30 = arith.addf %22, %29 : vector<1x1xf32>
    %c0_11 = arith.constant 0 : index
    %c0_12 = arith.constant 0 : index
    %31 = vector.load %arg5[%c0_11, %c0_12] : memref<1x1xf32, #tpu.memory_space<vmem>>, vector<1x1xf32>
    tpu.vector_store %arg5[%c0_11, %c0_12], %30 {strides = array<i32>} : memref<1x1xf32, #tpu.memory_space<vmem>>, vector<1x1xf32>,
    %c0_13 = arith.constant 0 : index
    %c0_14 = arith.constant 0 : index
    %32 = vector.load %arg6[%c0_13, %c0_14] : memref<1x1xf32, #tpu.memory_space<vmem>>, vector<1x1xf32>
    %33 = vector.shape_cast %19 : vector<128x13xf32> to vector<1x128x13xf32>
    %cst_15 = arith.constant dense<0.000000e+00> : vector<1xf32>
    %34 = vector.multi_reduction <add>, %33, %cst_15 [1, 2] : vector<1x128x13xf32> to vector<1xf32>
    %35 = vector.shape_cast %34 : vector<1xf32> to vector<1x1x1xf32>
    %36 = vector.extract %35[0, 0, 0] : f32 from vector<1x1x1xf32>
    %37 = vector.broadcast %36 : f32 to vector<1x1xf32>
    %38 = arith.addf %32, %37 : vector<1x1xf32>
    %c0_16 = arith.constant 0 : index
    %c0_17 = arith.constant 0 : index
    %39 = vector.load %arg6[%c0_16, %c0_17] : memref<1x1xf32, #tpu.memory_space<vmem>>, vector<1x1xf32>
    tpu.vector_store %arg6[%c0_16, %c0_17], %38 {strides = array<i32>} : memref<1x1xf32, #tpu.memory_space<vmem>>, vector<1x1xf32>,
    %c4_i32 = arith.constant 4 : i32
    %40 = arith.cmpi eq, %arg0, %c4_i32 : i32
    %41 = arith.extui %40 : i1 to i32
    %c0_i32_18 = arith.constant 0 : i32
    %42 = arith.cmpi ne, %41, %c0_i32_18 : i32
    scf.if %42 {
      %c0_19 = arith.constant 0 : index
      %c0_20 = arith.constant 0 : index
      %43 = vector.load %arg5[%c0_19, %c0_20] : memref<1x1xf32, #tpu.memory_space<vmem>>, vector<1x1xf32>
      %c0_21 = arith.constant 0 : index
      %c0_22 = arith.constant 0 : index
      %44 = vector.load %arg6[%c0_21, %c0_22] : memref<1x1xf32, #tpu.memory_space<vmem>>, vector<1x1xf32>
      %45 = arith.divf %43, %44 : vector<1x1xf32>
      %c0_23 = arith.constant 0 : index
      %c0_24 = arith.constant 0 : index
      %46 = vector.load %arg4[%c0_23, %c0_24] : memref<1x1xf32, #tpu.memory_space<vmem>>, vector<1x1xf32>
      tpu.vector_store %arg4[%c0_23, %c0_24], %45 {strides = array<i32>} : memref<1x1xf32, #tpu.memory_space<vmem>>, vector<1x1xf32>,
    } else {
    }
    return
  }
  func.func @transform_0(%arg0: i32) -> (i32, i32) {
    %c0_i32 = arith.constant 0 : i32
    %c0_i32_0 = arith.constant 0 : i32
    return %arg0, %c0_i32 : i32, i32
  }
  func.func @transform_1(%arg0: i32) -> (i32, i32) {
    %c0_i32 = arith.constant 0 : i32
    %c0_i32_0 = arith.constant 0 : i32
    return %arg0, %c0_i32 : i32, i32
  }
  func.func @transform_2(%arg0: i32) -> (i32, i32) {
    %c0_i32 = arith.constant 0 : i32
    %c0_i32_0 = arith.constant 0 : i32
    %c0_i32_1 = arith.constant 0 : i32
    return %c0_i32, %c0_i32_0 : i32, i32
  }
  func.func @transform_3(%arg0: i32) -> (i32, i32) {
    %c0_i32 = arith.constant 0 : i32
    %c0_i32_0 = arith.constant 0 : i32
    %c0_i32_1 = arith.constant 0 : i32
    return %c0_i32, %c0_i32_0 : i32, i32
  }
}

</mosaic_0001>

<llo_original>
// kernel: tpu_custom_call.1
$region0: #{tpu_custom_call.1}
  #allocation0 [shape = 'u32[]', space=smem, size = 0x4, offset = 0x4, fixed_abs, tag = 'smem constant byte address 0x4 - core index']
  #allocation1 [shape = 'u32[144,128]{1,0:T(1,128)}', space=vmem, size = 0x12000, scoped, tag = 'internal scratch']
  #allocation2 [shape = 'f32[1,1]{1,0:T(1,128)}', space=vmem, size = 0x200, scoped, tag = 'scratch operand']
  #allocation3 [shape = 'f32[1,1]{1,0:T(1,128)}', space=vmem, size = 0x200, scoped, tag = 'scratch operand']
  %s0 = inlined_call_operand.vmem [shape: f32[600,13], index: 0, kind: input, shape index: {}]
  %s1 = inlined_call_operand.vmem [shape: s32[600,1], index: 1, kind: input, shape index: {}]
  %s2 = inlined_call_operand.vmem [shape: f32[1,13], index: 2, kind: input, shape index: {}]
  %s3 = inlined_call_operand.hbm [shape: f32[1,1], index: 3, kind: output, shape index: {}]
  %s4 = sld [smem:[#allocation0]]
  $region53: #{tpu_custom_call.1} parent=0
    _
  %s6 = ssub.s32 1, %s4
  %s7 = scalar_select 0, %s6, %s4
  $region1: #{tpu_custom_call.1} parent=0
    #allocation4 [shape = 'u8[512]{0}', space=vmem, size = 0x400, scoped, tag = 'output window, operand 0, single buffered']
    #allocation5 [shape = 's32[2]{0}', space=sflag, size = 0x8, scoped, tag = 'scoped memory for tpu_custom_call.1']
    %8 = vsyncpa [#allocation5], 0
    loop: start=0, step=1, limit=7
    $region2: #{tpu_custom_call.1} parent=1 // loop_pre_header
      _
    $region3: #{tpu_custom_call.1} parent=1 // loop_header
      %s10 = sphi 0, %s14
      %p11 = scmp.ge.s32.totalorder %s10, 7
      %s20 = sphi 0, %s22
      %s23 = sphi 0, %s20
      %s24 = sphi 0, %s23
      %s40 = sphi 0, %s24
      %s46 = sphi 0, %s48
      %s49 = sphi 0, %s46
      %s50 = sphi 0, %s49
      %s66 = sphi 0, %s50
      %s70 = sphi 0, %s70
      %s72 = sphi 0, %s70
      %s73 = sphi 0, %s72
      %s87 = sphi 0, %s73
      %s91 = sphi 0, %s91
      %s93 = sphi 0, %s91
      %s94 = sphi 0, %s93
      %s108 = sphi 0, %s94
    $region4: #{tpu_custom_call.1} parent=1 // loop_header_branch
      %13 = sbr.rel (%p11) target = $region8
    $region5: #{tpu_custom_call.1} parent=1 // loop_body
      %s15 = ssub.s32 %s10, 1
      %s16 = ssub.s32 %s10, 2
      %s17 = sadd.s32 %s10, 1
      %s18 = ssub.s32 %s10, %s17
      %p19 = scmp.eq.s32.totalorder %s18, 0
      %s21 = sadd.s32 %s20, 1
      %s22 = scalar_select %p19, %s20, %s21
      %p25 = pneg %p19
      %p26 = scmp.eq.s32.totalorder %s10, 4
      %p27 = por %p25, %p26
      %p28 = scmp.ne.s32.totalorder %s20, %s23
      %p29 = scmp.eq.s32.totalorder %s10, 0
      %p30 = por %p28, %p29
      %p31 = scmp.ne.s32.totalorder %s20, %s23
      %p32 = scmp.eq.s32.totalorder %s15, 4
      %p33 = por %p31, %p32
      %p34 = scmp.ne.s32.totalorder %s23, %s24
      %p35 = scmp.eq.s32.totalorder %s15, 0
      %p36 = por %p34, %p35
      %p37 = scmp.ne.s32.totalorder %s23, %s24
      %p38 = scmp.eq.s32.totalorder %s16, 4
      %p39 = por %p37, %p38
      %p41 = scmp.ne.s32.totalorder %s24, %s40
      %p42 = scmp.eq.s32.totalorder %s16, 0
      %p43 = por %p41, %p42
      %s44 = ssub.s32 %s10, %s17
      %p45 = scmp.eq.s32.totalorder %s44, 0
      %s47 = sadd.s32 %s46, 1
      %s48 = scalar_select %p45, %s46, %s47
      %p51 = pneg %p45
      %p52 = scmp.eq.s32.totalorder %s10, 4
      %p53 = por %p51, %p52
      %p54 = scmp.ne.s32.totalorder %s46, %s49
      %p55 = scmp.eq.s32.totalorder %s10, 0
      %p56 = por %p54, %p55
      %p57 = scmp.ne.s32.totalorder %s46, %s49
      %p58 = scmp.eq.s32.totalorder %s15, 4
      %p59 = por %p57, %p58
      %p60 = scmp.ne.s32.totalorder %s49, %s50
      %p61 = scmp.eq.s32.totalorder %s15, 0
      %p62 = por %p60, %p61
      %p63 = scmp.ne.s32.totalorder %s49, %s50
      %p64 = scmp.eq.s32.totalorder %s16, 4
      %p65 = por %p63, %p64
      %p67 = scmp.ne.s32.totalorder %s50, %s66
      %p68 = scmp.eq.s32.totalorder %s16, 0
      %p69 = por %p67, %p68
      %s71 = sadd.s32 %s70, 1
      %p74 = scmp.eq.s32.totalorder %s10, 4
      %p75 = scmp.ne.s32.totalorder %s70, %s72
      %p76 = scmp.eq.s32.totalorder %s10, 0
      %p77 = por %p75, %p76
      %p78 = scmp.ne.s32.totalorder %s70, %s72
      %p79 = scmp.eq.s32.totalorder %s15, 4
      %p80 = por %p78, %p79
      %p81 = scmp.ne.s32.totalorder %s72, %s73
      %p82 = scmp.eq.s32.totalorder %s15, 0
      %p83 = por %p81, %p82
      %p84 = scmp.ne.s32.totalorder %s72, %s73
      %p85 = scmp.eq.s32.totalorder %s16, 4
      %p86 = por %p84, %p85
      %p88 = scmp.ne.s32.totalorder %s73, %s87
      %p89 = scmp.eq.s32.totalorder %s16, 0
      %p90 = por %p88, %p89
      %s92 = sadd.s32 %s91, 1
      %p95 = scmp.eq.s32.totalorder %s10, 4
      %p96 = scmp.ne.s32.totalorder %s91, %s93
      %p97 = scmp.eq.s32.totalorder %s10, 0
      %p98 = por %p96, %p97
      %p99 = scmp.ne.s32.totalorder %s91, %s93
      %p100 = scmp.eq.s32.totalorder %s15, 4
      %p101 = por %p99, %p100
      %p102 = scmp.ne.s32.totalorder %s93, %s94
      %p103 = scmp.eq.s32.totalorder %s15, 0
      %p104 = por %p102, %p103
      %p105 = scmp.ne.s32.totalorder %s93, %s94
      %p106 = scmp.eq.s32.totalorder %s16, 4
      %p107 = por %p105, %p106
      %p109 = scmp.ne.s32.totalorder %s94, %s108
      %p110 = scmp.eq.s32.totalorder %s16, 0
      %p111 = por %p109, %p110
      %p112 = scmp.le.s32.totalorder 1, %s10
      %p113 = scmp.lt.s32.totalorder %s10, 6
      %p114 = pnand %p112, %p113
      %p115 = pneg %p114
      // Predicated region
      $region9: #{tpu_custom_call.1} parent=5 // pred_check
        _
      $region10: #{tpu_custom_call.1} parent=5 // pred_check_branch
        %117 = sbr.rel (%p114) target = $region12
      $region11: #{tpu_custom_call.1} parent=5 // pred_region
        %s118 = ssub.s32 %s10, 1
        // Predicated region
        $region13: #{tpu_custom_call.1} parent=11 // pred_check
          %p119 = pneg %p83
        $region14: #{tpu_custom_call.1} parent=11 // pred_check_branch
          %121 = sbr.rel (%p119) target = $region16
        $region15: #{tpu_custom_call.1} parent=11 // pred_region
          _
        $region16: #{tpu_custom_call.1} parent=11 // pred_fallthru
          _
      $region12: #{tpu_custom_call.1} parent=5 // pred_fallthru
        _
      %p122 = scmp.lt.s32.totalorder %s10, 5
      // Predicated region
      $region17: #{tpu_custom_call.1} parent=5 // pred_check
        %p123 = pneg %p122
      $region18: #{tpu_custom_call.1} parent=5 // pred_check_branch
        %125 = sbr.rel (%p123) target = $region20
      $region19: #{tpu_custom_call.1} parent=5 // pred_region
        // Predicated region
        $region21: #{tpu_custom_call.1} parent=19 // pred_check
          %p126 = pneg %p30
        $region22: #{tpu_custom_call.1} parent=19 // pred_check_branch
          %128 = sbr.rel (%p126) target = $region24
        $region23: #{tpu_custom_call.1} parent=19 // pred_region
          %s129 = smul.u32 16, %s10
          %s130 = ssub.s32 75, %s129
          %p131 = scmp.lt.s32.totalorder %s130, 16
          %s132 = scalar_select %p131, %s130, 16
          %s133 = smul.u32 128, %s132
          %p134 = scmp.lt.s32.totalorder %s129, 74
          %s135 = scalar_select %p134, %s129, 74
          %s136 = smul.addr %s135, 8
          %s137 = scalar_lea.vmem %s0, %s136
          %s138 = smul.u32 16, %s10
          %s139 = ssub.s32 75, %s138
          %p140 = scmp.lt.s32.totalorder %s139, 16
          %s141 = scalar_select %p140, %s139, 16
          %s142 = smul.u32 128, %s141
        $region24: #{tpu_custom_call.1} parent=19 // pred_fallthru
          _
        // Predicated region
        $region25: #{tpu_custom_call.1} parent=19 // pred_check
          %p143 = pneg %p56
        $region26: #{tpu_custom_call.1} parent=19 // pred_check_branch
          %145 = sbr.rel (%p143) target = $region28
        $region27: #{tpu_custom_call.1} parent=19 // pred_region
          %s146 = smul.u32 16, %s10
          %s147 = ssub.s32 75, %s146
          %p148 = scmp.lt.s32.totalorder %s147, 16
          %s149 = scalar_select %p148, %s147, 16
          %s150 = smul.u32 128, %s149
          %p151 = scmp.lt.s32.totalorder %s146, 74
          %s152 = scalar_select %p151, %s146, 74
          %s153 = smul.addr %s152, 8
          %s154 = scalar_lea.vmem %s1, %s153
          %s155 = smul.u32 16, %s10
          %s156 = ssub.s32 75, %s155
          %p157 = scmp.lt.s32.totalorder %s156, 16
          %s158 = scalar_select %p157, %s156, 16
          %s159 = smul.u32 128, %s158
        $region28: #{tpu_custom_call.1} parent=19 // pred_fallthru
          _
      $region20: #{tpu_custom_call.1} parent=5 // pred_fallthru
        _
      %p160 = scmp.le.s32.totalorder 1, %s10
      %p161 = scmp.lt.s32.totalorder %s10, 6
      %p162 = pnand %p160, %p161
      %p163 = pneg %p162
      // Predicated region
      $region29: #{tpu_custom_call.1} parent=5 // pred_check
        _
      $region30: #{tpu_custom_call.1} parent=5 // pred_check_branch
        %165 = sbr.rel (%p162) target = $region32
      $region31: #{tpu_custom_call.1} parent=5 // pred_region
        %s166 = ssub.s32 %s10, 1
        %s167 = smul.u32 16, %s15
        %s168 = ssub.s32 75, %s167
        %p169 = scmp.lt.s32.totalorder %s168, 16
        %s170 = scalar_select %p169, %s168, 16
        %s171 = smul.u32 128, %s170
        %p172 = scmp.lt.s32.totalorder %s167, 74
        %s173 = scalar_select %p172, %s167, 74
        %s174 = smul.addr %s173, 8
        %s175 = scalar_lea.vmem %s0, %s174
        %p176 = pneg %p36
        %p177 = pneg %p33
        %s178 = smul.u32 16, %s15
        %s179 = ssub.s32 75, %s178
        %p180 = scmp.lt.s32.totalorder %s179, 16
        %s181 = scalar_select %p180, %s179, 16
        %s182 = smul.u32 128, %s181
        %p183 = scmp.lt.s32.totalorder %s178, 74
        %s184 = scalar_select %p183, %s178, 74
        %s185 = smul.addr %s184, 8
        %s186 = scalar_lea.vmem %s1, %s185
        %p187 = pneg %p62
        %p188 = pneg %p59
        %p189 = pneg %p83
        %p190 = pneg %p80
        %p191 = pneg %p104
        %p192 = pneg %p101
        %s193 = smul.u32 16, %s15
        %s194 = ssub.s32 75, %s193
        %p195 = scmp.lt.s32.totalorder %s194, 16
        %s196 = scalar_select %p195, %s194, 16
        %s197 = smul.u32 128, %s196
        %p198 = scmp.lt.s32.totalorder %s193, 74
        %s199 = scalar_select %p198, %s193, 74
        %s200 = smul.addr %s199, 8
        %s201 = scalar_lea.vmem %s0, %s200
        %s202 = smul.u32 16, %s15
        %s203 = ssub.s32 75, %s202
        %p204 = scmp.lt.s32.totalorder %s203, 16
        %s205 = scalar_select %p204, %s203, 16
        %s206 = smul.u32 128, %s205
        %s207 = smul.u32 16, %s15
        %s208 = ssub.s32 75, %s207
        %p209 = scmp.lt.s32.totalorder %s208, 16
        %s210 = scalar_select %p209, %s208, 16
        %s211 = smul.u32 128, %s210
        %p212 = scmp.lt.s32.totalorder %s207, 74
        %s213 = scalar_select %p212, %s207, 74
        %s214 = smul.addr %s213, 8
        %s215 = scalar_lea.vmem %s1, %s214
        %s216 = smul.u32 16, %s15
        %s217 = ssub.s32 75, %s216
        %p218 = scmp.lt.s32.totalorder %s217, 16
        %s219 = scalar_select %p218, %s217, 16
        %s220 = smul.u32 128, %s219
        %p221 = scmp.eq.s32.totalorder %s15, 0
        // Predicated region
        $region33: #{tpu_custom_call.1} parent=31 // pred_check
          %p222 = pneg %p221
        $region34: #{tpu_custom_call.1} parent=31 // pred_check_branch
          %224 = sbr.rel (%p222) target = $region36
        $region35: #{tpu_custom_call.1} parent=31 // pred_region
          %vm225 = vcmask 0
          %226 = vst.msk [vmem:[#allocation2] sm:$0x1] %vm225, 0.0
          %227 = vst.msk [vmem:[#allocation3] sm:$0x1] %vm225, 0.0
        $region36: #{tpu_custom_call.1} parent=31 // pred_fallthru
          _
        %v228 = vld [vmem:[%s201] sm:$0xff]
        %v229 = vld [vmem:[%s201 + $0x8] sm:$0xff]
        %v230 = vld [vmem:[%s201 + $0x10] sm:$0xff]
        %v231 = vld [vmem:[%s201 + $0x18] sm:$0xff]
        %v232 = vld [vmem:[%s201 + $0x20] sm:$0xff]
        %v233 = vld [vmem:[%s201 + $0x28] sm:$0xff]
        %v234 = vld [vmem:[%s201 + $0x30] sm:$0xff]
        %v235 = vld [vmem:[%s201 + $0x38] sm:$0xff]
        %v236 = vld [vmem:[%s201 + $0x40] sm:$0xff]
        %v237 = vld [vmem:[%s201 + $0x48] sm:$0xff]
        %v238 = vld [vmem:[%s201 + $0x50] sm:$0xff]
        %v239 = vld [vmem:[%s201 + $0x58] sm:$0xff]
        %v240 = vld [vmem:[%s201 + $0x60] sm:$0xff]
        %v241 = vld [vmem:[%s201 + $0x68] sm:$0xff]
        %v242 = vld [vmem:[%s201 + $0x70] sm:$0xff]
        %v243 = vld [vmem:[%s201 + $0x78] sm:$0xff]
        %v244 = vld [vmem:[%s215] sm:$0xff]
        %v245 = vld [vmem:[%s215 + $0x8] sm:$0xff]
        %v246 = vld [vmem:[%s215 + $0x10] sm:$0xff]
        %v247 = vld [vmem:[%s215 + $0x18] sm:$0xff]
        %v248 = vld [vmem:[%s215 + $0x20] sm:$0xff]
        %v249 = vld [vmem:[%s215 + $0x28] sm:$0xff]
        %v250 = vld [vmem:[%s215 + $0x30] sm:$0xff]
        %v251 = vld [vmem:[%s215 + $0x38] sm:$0xff]
        %v252 = vld [vmem:[%s215 + $0x40] sm:$0xff]
        %v253 = vld [vmem:[%s215 + $0x48] sm:$0xff]
        %v254 = vld [vmem:[%s215 + $0x50] sm:$0xff]
        %v255 = vld [vmem:[%s215 + $0x58] sm:$0xff]
        %v256 = vld [vmem:[%s215 + $0x60] sm:$0xff]
        %v257 = vld [vmem:[%s215 + $0x68] sm:$0xff]
        %v258 = vld [vmem:[%s215 + $0x70] sm:$0xff]
        %v259 = vld [vmem:[%s215 + $0x78] sm:$0xff]
        %v260 = vld [vmem:[%s2] sm:$0x1]
        %v261 = vlaneseq
        %v262 = vshrl.u32 %v261, 7
        %v263 = vadd.s32 %v262, 8
        %v264 = vadd.s32 %v262, 16
        %v265 = vadd.s32 %v262, 24
        %v266 = vadd.s32 %v262, 32
        %v267 = vadd.s32 %v262, 40
        %v268 = vadd.s32 %v262, 48
        %v269 = vadd.s32 %v262, 56
        %v270 = vadd.s32 %v262, 64
        %v271 = vadd.s32 %v262, 72
        %v272 = vadd.s32 %v262, 80
        %v273 = vadd.s32 %v262, 88
        %v274 = vadd.s32 %v262, 96
        %v275 = vadd.s32 %v262, 104
        %v276 = vadd.s32 %v262, 112
        %v277 = vadd.s32 %v262, 120
        %s278 = smul.u32 %s15, 128
        %v279 = vstv %s278
        %v280 = vadd.s32 %v262, %v279
        %v281 = vadd.s32 %v263, %v279
        %v282 = vadd.s32 %v264, %v279
        %v283 = vadd.s32 %v265, %v279
        %v284 = vadd.s32 %v266, %v279
        %v285 = vadd.s32 %v267, %v279
        %v286 = vadd.s32 %v268, %v279
        %v287 = vadd.s32 %v269, %v279
        %v288 = vadd.s32 %v270, %v279
        %v289 = vadd.s32 %v271, %v279
        %v290 = vadd.s32 %v272, %v279
        %v291 = vadd.s32 %v273, %v279
        %v292 = vadd.s32 %v274, %v279
        %v293 = vadd.s32 %v275, %v279
        %v294 = vadd.s32 %v276, %v279
        %v295 = vadd.s32 %v277, %v279
        %v296 = vlaneseq
        %v297 = vand.u32 %v296, 127
        %298 = vset.pattern.permute.xlu0 0
        %299 = vperm.xlu0 %298, %v244
        %v300 = vpop.permute.xlu0 %299
        %301 = vset.pattern.permute.xlu0 0
        %302 = vperm.xlu0 %301, %v245
        %v303 = vpop.permute.xlu0 %302
        %304 = vset.pattern.permute.xlu0 0
        %305 = vperm.xlu0 %304, %v246
        %v306 = vpop.permute.xlu0 %305
        %307 = vset.pattern.permute.xlu0 0
        %308 = vperm.xlu0 %307, %v247
        %v309 = vpop.permute.xlu0 %308
        %310 = vset.pattern.permute.xlu0 0
        %311 = vperm.xlu0 %310, %v248
        %v312 = vpop.permute.xlu0 %311
        %313 = vset.pattern.permute.xlu0 0
        %314 = vperm.xlu0 %313, %v249
        %v315 = vpop.permute.xlu0 %314
        %316 = vset.pattern.permute.xlu0 0
        %317 = vperm.xlu0 %316, %v250
        %v318 = vpop.permute.xlu0 %317
        %319 = vset.pattern.permute.xlu0 0
        %320 = vperm.xlu0 %319, %v251
        %v321 = vpop.permute.xlu0 %320
        %322 = vset.pattern.permute.xlu0 0
        %323 = vperm.xlu0 %322, %v252
        %v324 = vpop.permute.xlu0 %323
        %325 = vset.pattern.permute.xlu0 0
        %326 = vperm.xlu0 %325, %v253
        %v327 = vpop.permute.xlu0 %326
        %328 = vset.pattern.permute.xlu0 0
        %329 = vperm.xlu0 %328, %v254
        %v330 = vpop.permute.xlu0 %329
        %331 = vset.pattern.permute.xlu0 0
        %332 = vperm.xlu0 %331, %v255
        %v333 = vpop.permute.xlu0 %332
        %334 = vset.pattern.permute.xlu0 0
        %335 = vperm.xlu0 %334, %v256
        %v336 = vpop.permute.xlu0 %335
        %337 = vset.pattern.permute.xlu0 0
        %338 = vperm.xlu0 %337, %v257
        %v339 = vpop.permute.xlu0 %338
        %340 = vset.pattern.permute.xlu0 0
        %341 = vperm.xlu0 %340, %v258
        %v342 = vpop.permute.xlu0 %341
        %343 = vset.pattern.permute.xlu0 0
        %344 = vperm.xlu0 %343, %v259
        %v345 = vpop.permute.xlu0 %344
        %vm346 = vcmp.eq.s32.totalorder %v297, %v300
        %vm347 = vcmp.eq.s32.totalorder %v297, %v303
        %vm348 = vcmp.eq.s32.totalorder %v297, %v306
        %vm349 = vcmp.eq.s32.totalorder %v297, %v309
        %vm350 = vcmp.eq.s32.totalorder %v297, %v312
        %vm351 = vcmp.eq.s32.totalorder %v297, %v315
        %vm352 = vcmp.eq.s32.totalorder %v297, %v318
        %vm353 = vcmp.eq.s32.totalorder %v297, %v321
        %vm354 = vcmp.eq.s32.totalorder %v297, %v324
        %vm355 = vcmp.eq.s32.totalorder %v297, %v327
        %vm356 = vcmp.eq.s32.totalorder %v297, %v330
        %vm357 = vcmp.eq.s32.totalorder %v297, %v333
        %vm358 = vcmp.eq.s32.totalorder %v297, %v336
        %vm359 = vcmp.eq.s32.totalorder %v297, %v339
        %vm360 = vcmp.eq.s32.totalorder %v297, %v342
        %vm361 = vcmp.eq.s32.totalorder %v297, %v345
        %vm362 = vcmp.lt.s32.totalorder %v280, 600
        %vm363 = vcmp.lt.s32.totalorder %v281, 600
        %vm364 = vcmp.lt.s32.totalorder %v282, 600
        %vm365 = vcmp.lt.s32.totalorder %v283, 600
        %vm366 = vcmp.lt.s32.totalorder %v284, 600
        %vm367 = vcmp.lt.s32.totalorder %v285, 600
        %vm368 = vcmp.lt.s32.totalorder %v286, 600
        %vm369 = vcmp.lt.s32.totalorder %v287, 600
        %vm370 = vcmp.lt.s32.totalorder %v288, 600
        %vm371 = vcmp.lt.s32.totalorder %v289, 600
        %vm372 = vcmp.lt.s32.totalorder %v290, 600
        %vm373 = vcmp.lt.s32.totalorder %v291, 600
        %vm374 = vcmp.lt.s32.totalorder %v292, 600
        %vm375 = vcmp.lt.s32.totalorder %v293, 600
        %vm376 = vcmp.lt.s32.totalorder %v294, 600
        %vm377 = vcmp.lt.s32.totalorder %v295, 600
        %vm378 = vmand %vm346, %vm362
        %vm379 = vmand %vm347, %vm363
        %vm380 = vmand %vm348, %vm364
        %vm381 = vmand %vm349, %vm365
        %vm382 = vmand %vm350, %vm366
        %vm383 = vmand %vm351, %vm367
        %vm384 = vmand %vm352, %vm368
        %vm385 = vmand %vm353, %vm369
        %vm386 = vmand %vm354, %vm370
        %vm387 = vmand %vm355, %vm371
        %vm388 = vmand %vm356, %vm372
        %vm389 = vmand %vm357, %vm373
        %vm390 = vmand %vm358, %vm374
        %vm391 = vmand %vm359, %vm375
        %vm392 = vmand %vm360, %vm376
        %vm393 = vmand %vm361, %vm377
        %v395 = vlaneseq
        %v396 = vshrl.u32 %v395, 7
        %v397 = vsub.s32 0, %v396
        %v398 = vrot.slane %v260, %v397
        %v400 = vsel %vm378, %v398, 0.0
        %v401 = vsel %vm379, %v398, 0.0
        %v402 = vsel %vm380, %v398, 0.0
        %v403 = vsel %vm381, %v398, 0.0
        %v404 = vsel %vm382, %v398, 0.0
        %v405 = vsel %vm383, %v398, 0.0
        %v406 = vsel %vm384, %v398, 0.0
        %v407 = vsel %vm385, %v398, 0.0
        %v408 = vsel %vm386, %v398, 0.0
        %v409 = vsel %vm387, %v398, 0.0
        %v410 = vsel %vm388, %v398, 0.0
        %v411 = vsel %vm389, %v398, 0.0
        %v412 = vsel %vm390, %v398, 0.0
        %v413 = vsel %vm391, %v398, 0.0
        %v414 = vsel %vm392, %v398, 0.0
        %v415 = vsel %vm393, %v398, 0.0
        %v416 = vsel %vm378, %v228, 0.0
        %v417 = vsel %vm379, %v229, 0.0
        %v418 = vsel %vm380, %v230, 0.0
        %v419 = vsel %vm381, %v231, 0.0
        %v420 = vsel %vm382, %v232, 0.0
        %v421 = vsel %vm383, %v233, 0.0
        %v422 = vsel %vm384, %v234, 0.0
        %v423 = vsel %vm385, %v235, 0.0
        %v424 = vsel %vm386, %v236, 0.0
        %v425 = vsel %vm387, %v237, 0.0
        %v426 = vsel %vm388, %v238, 0.0
        %v427 = vsel %vm389, %v239, 0.0
        %v428 = vsel %vm390, %v240, 0.0
        %v429 = vsel %vm391, %v241, 0.0
        %v430 = vsel %vm392, %v242, 0.0
        %v431 = vsel %vm393, %v243, 0.0
        %v432 = vld [vmem:[#allocation2] sm:$0x1]
        %v433 = vmul.f32 %v400, %v416
        %v434 = vmul.f32 %v401, %v417
        %v435 = vmul.f32 %v402, %v418
        %v436 = vmul.f32 %v403, %v419
        %v437 = vmul.f32 %v404, %v420
        %v438 = vmul.f32 %v405, %v421
        %v439 = vmul.f32 %v406, %v422
        %v440 = vmul.f32 %v407, %v423
        %v441 = vmul.f32 %v408, %v424
        %v442 = vmul.f32 %v409, %v425
        %v443 = vmul.f32 %v410, %v426
        %v444 = vmul.f32 %v411, %v427
        %v445 = vmul.f32 %v412, %v428
        %v446 = vmul.f32 %v413, %v429
        %v447 = vmul.f32 %v414, %v430
        %v448 = vmul.f32 %v415, %v431
        %vm449 = vcmask 105472
        %v450 = vsel %vm449, %v433, 0.0
        %v451 = vsel %vm449, %v434, 0.0
        %v452 = vadd.f32 %v450, %v451
        %v453 = vsel %vm449, %v435, 0.0
        %v454 = vadd.f32 %v452, %v453
        %v455 = vsel %vm449, %v436, 0.0
        %v456 = vadd.f32 %v454, %v455
        %v457 = vsel %vm449, %v437, 0.0
        %v458 = vadd.f32 %v456, %v457
        %v459 = vsel %vm449, %v438, 0.0
        %v460 = vadd.f32 %v458, %v459
        %v461 = vsel %vm449, %v439, 0.0
        %v462 = vadd.f32 %v460, %v461
        %v463 = vsel %vm449, %v440, 0.0
        %v464 = vadd.f32 %v462, %v463
        %v465 = vsel %vm449, %v441, 0.0
        %v466 = vadd.f32 %v464, %v465
        %v467 = vsel %vm449, %v442, 0.0
        %v468 = vadd.f32 %v466, %v467
        %v469 = vsel %vm449, %v443, 0.0
        %v470 = vadd.f32 %v468, %v469
        %v471 = vsel %vm449, %v444, 0.0
        %v472 = vadd.f32 %v470, %v471
        %v473 = vsel %vm449, %v445, 0.0
        %v474 = vadd.f32 %v472, %v473
        %v475 = vsel %vm449, %v446, 0.0
        %v476 = vadd.f32 %v474, %v475
        %v477 = vsel %vm449, %v447, 0.0
        %v478 = vadd.f32 %v476, %v477
        %v479 = vsel %vm449, %v448, 0.0
        %v480 = vadd.f32 %v478, %v479
        %481 = vadd.xlane.f32.xlu0 %v480
        %v482 = vpop.xlane.xlu0 %481
        %v483 = vrot.slane %v482, 4
        %v484 = vadd.f32 %v482, %v483
        %v485 = vrot.slane %v484, 2
        %v486 = vadd.f32 %v484, %v485
        %v487 = vrot.slane %v486, 1
        %v488 = vadd.f32 %v486, %v487
        %s489 = vtos %v488
        %s490 = ssub.f32 0.0, %s489
        %v491 = vstv %s490
        %v492 = vadd.f32 %v432, %v491
        %vm493 = vcmask 0
        %494 = vst.msk [vmem:[#allocation2] sm:$0x1] %vm493, %v492
        %v495 = vld [vmem:[#allocation3] sm:$0x1]
        %v496 = vsel %vm449, %v400, 0.0
        %v497 = vsel %vm449, %v401, 0.0
        %v498 = vadd.f32 %v496, %v497
        %v499 = vsel %vm449, %v402, 0.0
        %v500 = vadd.f32 %v498, %v499
        %v501 = vsel %vm449, %v403, 0.0
        %v502 = vadd.f32 %v500, %v501
        %v503 = vsel %vm449, %v404, 0.0
        %v504 = vadd.f32 %v502, %v503
        %v505 = vsel %vm449, %v405, 0.0
        %v506 = vadd.f32 %v504, %v505
        %v507 = vsel %vm449, %v406, 0.0
        %v508 = vadd.f32 %v506, %v507
        %v509 = vsel %vm449, %v407, 0.0
        %v510 = vadd.f32 %v508, %v509
        %v511 = vsel %vm449, %v408, 0.0
        %v512 = vadd.f32 %v510, %v511
        %v513 = vsel %vm449, %v409, 0.0
        %v514 = vadd.f32 %v512, %v513
        %v515 = vsel %vm449, %v410, 0.0
        %v516 = vadd.f32 %v514, %v515
        %v517 = vsel %vm449, %v411, 0.0
        %v518 = vadd.f32 %v516, %v517
        %v519 = vsel %vm449, %v412, 0.0
        %v520 = vadd.f32 %v518, %v519
        %v521 = vsel %vm449, %v413, 0.0
        %v522 = vadd.f32 %v520, %v521
        %v523 = vsel %vm449, %v414, 0.0
        %v524 = vadd.f32 %v522, %v523
        %v525 = vsel %vm449, %v415, 0.0
        %v526 = vadd.f32 %v524, %v525
        %527 = vadd.xlane.f32.xlu0 %v526
        %v528 = vpop.xlane.xlu0 %527
        %v529 = vrot.slane %v528, 4
        %v530 = vadd.f32 %v528, %v529
        %v531 = vrot.slane %v530, 2
        %v532 = vadd.f32 %v530, %v531
        %v533 = vrot.slane %v532, 1
        %v534 = vadd.f32 %v532, %v533
        %s535 = vtos %v534
        %v536 = vstv %s535
        %v537 = vadd.f32 %v495, %v536
        %538 = vst.msk [vmem:[#allocation3] sm:$0x1] %vm493, %v537
        %p539 = scmp.eq.s32.totalorder %s15, 4
        // Predicated region
        $region37: #{tpu_custom_call.1} parent=31 // pred_check
          %p540 = pneg %p539
        $region38: #{tpu_custom_call.1} parent=31 // pred_check_branch
          %542 = sbr.rel (%p540) target = $region40
        $region39: #{tpu_custom_call.1} parent=31 // pred_region
          %v543 = vld [vmem:[#allocation2] sm:$0x1]
          %v544 = vld [vmem:[#allocation3] sm:$0x1]
          %v545 = vrcp.pop %v544
          %v546 = vmul.f32 %v543, %v545
          %547 = vst.msk [vmem:[#allocation4] sm:$0x1] %vm493, %v546
        $region40: #{tpu_custom_call.1} parent=31 // pred_fallthru
          _
        // Predicated region
        $region41: #{tpu_custom_call.1} parent=31 // pred_check
          %p548 = pneg %p101
        $region42: #{tpu_custom_call.1} parent=31 // pred_check_branch
          %550 = sbr.rel (%p548) target = $region44
        $region43: #{tpu_custom_call.1} parent=31 // pred_region
          %s552 = ssub.s32 16, 16
          %553 = vsyncadd [#allocation5], %s552
          %s555 = sshll.u32 [#allocation4], 4
          %s556 = int_to_ptr.vmem [resolvable:$true] %s555
          %558 = dma.vmem_to_hbm [thread:$0]  %s556, 16, %s3, [#allocation5]
        $region44: #{tpu_custom_call.1} parent=31 // pred_fallthru
          _
        // Predicated region
        $region45: #{tpu_custom_call.1} parent=31 // pred_check
          %p559 = pneg %p101
        $region46: #{tpu_custom_call.1} parent=31 // pred_check_branch
          %561 = sbr.rel (%p559) target = $region48
        $region47: #{tpu_custom_call.1} parent=31 // pred_region
          %562 = dma.done [#allocation5], 16
        $region48: #{tpu_custom_call.1} parent=31 // pred_fallthru
          _
      $region32: #{tpu_custom_call.1} parent=5 // pred_fallthru
        _
      %p563 = scmp.le.s32.totalorder 2, %s10
      // Predicated region
      $region49: #{tpu_custom_call.1} parent=5 // pred_check
        %p564 = pneg %p563
      $region50: #{tpu_custom_call.1} parent=5 // pred_check_branch
        %566 = sbr.rel (%p564) target = $region52
      $region51: #{tpu_custom_call.1} parent=5 // pred_region
        %s567 = ssub.s32 %s10, 2
      $region52: #{tpu_custom_call.1} parent=5 // pred_fallthru
        _
    $region6: #{tpu_custom_call.1} parent=1 // loop_footer
      %s14 = sadd.s32 1, %s10
    $region7: #{tpu_custom_call.1} parent=1 // loop_footer_branch
      %9 = sbr.rel target = $region3
    $region8: #{tpu_custom_call.1} parent=1 // loop_exit
      _
    %568 = vsyncpa [#allocation5], 1
    %s569 = scalar_lea.sflag [#allocation5], 1
    %570 = vsyncpa %s569, 1

</llo_original>
